<compile_context>
chip_gen: v6e
topology: v6e:2x2x1
jax: 0.10.0
libtpu: 0.0.40
codegen_flags: <defaults>
</compile_context>

<pallas_src>
import jax
import jax.numpy as jnp
from jax.experimental import pallas as pl
from jax.experimental.pallas import tpu as pltpu


def _softplus(z):
    # numerically stable softplus, matches torch.nn.Softplus (beta=1)
    return jnp.maximum(z, 0.0) + jnp.log1p(jnp.exp(-jnp.abs(z)))


def condition_network_kernel(x_ref, p_ref, o_ref):
    # x_ref: (1,1) f32 in SMEM -- the single consumed input value x[0,0]
    # p_ref: (72,128) f32 packed parameter slab in VMEM
    # o_ref: (1,128) f32 lane-dense output in VMEM (lanes 0:40 are real)
    xv = x_ref[0, 0]                               # scalar from SMEM

    w1 = p_ref[0:1, 0:32]                          # (1, 32)
    b1 = p_ref[1:2, 0:32]                          # (1, 32)
    b2 = p_ref[2:3, 0:32]                          # (1, 32)
    b3 = p_ref[3:4, :]                             # (1, 128)  (zero-padded)
    w2 = p_ref[8:40, 0:32]                         # (32, 32)
    w3 = p_ref[40:72, :]                           # (32, 128) (zero-padded)

    # fc1: in_features == 1 -> pure VPU scalar*vector, no MXU / no relayout
    h1 = jnp.maximum(xv * w1 + b1, 0.0)            # (1, 32)

    # fc2: 32 -> 32 (MXU, f32 accumulate)
    h2 = jnp.dot(h1, w2, preferred_element_type=jnp.float32) + b2
    h2 = jnp.maximum(h2, 0.0)                      # (1, 32)

    # fc3: 32 -> 128 (40 real output lanes, zero-padded) + Softplus
    z = jnp.dot(h2, w3, preferred_element_type=jnp.float32) + b3   # (1, 128)
    o_ref[...] = _softplus(z)                      # full-width lane-dense store


def pack_params(params):
    """Pack (w1,b1,w2,b2,w3,b3) into a single lane-dense (72,128) f32 slab."""
    w1, b1, w2, b2, w3, b3 = params
    slab = jnp.zeros((72, 128), jnp.float32)
    slab = slab.at[0, 0:32].set(w1.reshape(32))
    slab = slab.at[1, 0:32].set(b1.reshape(32))
    slab = slab.at[2, 0:32].set(b2.reshape(32))
    slab = slab.at[3, 0:40].set(b3.reshape(40))
    slab = slab.at[8:40, 0:32].set(w2)
    slab = slab.at[40:72, 0:40].set(w3)
    return slab


@jax.jit
def condition_network_forward(x, param_slab):
    """x: (B, F_in) float32; param_slab: pack_params(...) output.

    Returns (out[0, 0:20], out[0, 20:40]) exactly like the torch module.
    """
    # Only x[0, 0] is ever consumed -> feed it as a scalar via SMEM.
    x00 = x[0:1, 0:1].astype(jnp.float32)          # (1, 1)

    smem = pl.BlockSpec(memory_space=pltpu.MemorySpace.SMEM)
    vmem = pl.BlockSpec(memory_space=pltpu.MemorySpace.VMEM)

    out = pl.pallas_call(
        condition_network_kernel,
        out_shape=jax.ShapeDtypeStruct((1, 128), jnp.float32),
        in_specs=[smem, vmem],
        out_specs=vmem,
        cost_estimate=pl.CostEstimate(
            flops=10304,            # 64 + 2*32*32 + 2*32*128
            transcendentals=256,    # exp + log1p over 128 lanes
            bytes_accessed=37380,   # 4 + 72*128*4 + 128*4
        ),
    )(x00, param_slab)

    # glue: final slicing done outside the kernel (plain JAX, free views)
    return out[0, 0:20], out[0, 20:40]


def init_params(key):
    """Deterministic init mimicking torch.nn.Linear default (U(-1/sqrt(fan_in), +))."""
    def linear(key, fan_in, fan_out):
        kw, kb = jax.random.split(key)
        bound = 1.0 / jnp.sqrt(float(fan_in))
        w = jax.random.uniform(kw, (fan_in, fan_out), jnp.float32, -bound, bound)
        b = jax.random.uniform(kb, (1, fan_out), jnp.float32, -bound, bound)
        return w, b

    k1, k2, k3 = jax.random.split(key, 3)
    w1, b1 = linear(k1, 1, 32)
    w2, b2 = linear(k2, 32, 32)
    w3, b3 = linear(k3, 32, 40)
    return (w1, b1, w2, b2, w3, b3)


def _reference_forward(x, params):
    # pure-JAX reference for a quick sanity check (mirrors the torch module)
    w1, b1, w2, b2, w3, b3 = params
    h = x[:, 0:1]
    h = jnp.maximum(h @ w1 + b1, 0.0)
    h = jnp.maximum(h @ w2 + b2, 0.0)
    z = h @ w3 + b3
    out = jnp.maximum(z, 0.0) + jnp.log1p(jnp.exp(-jnp.abs(z)))
    return out[0, 0:20], out[0, 20:40]


if __name__ == "__main__":
    key = jax.random.PRNGKey(0)
    kx, kp = jax.random.split(key)

    B, F_in = 2, 4                      # small batch; only x[0, 0] is consumed
    x = jax.random.normal(kx, (B, F_in), jnp.float32)
    params = init_params(kp)
    slab = pack_params(params)          # one-time packing (done outside the hot path)

    out_a, out_b = condition_network_forward(x, slab)
    out_a = jax.block_until_ready(out_a)
    out_b = jax.block_until_ready(out_b)

    ref_a, ref_b = _reference_forward(x, params)
    assert out_a.shape == (20,) and out_b.shape == (20,)
    assert jnp.allclose(out_a, ref_a, atol=1e-5, rtol=1e-5)
    assert jnp.allclose(out_b, ref_b, atol=1e-5, rtol=1e-5)

    print("KERNEL_OK")
</pallas_src>

<mosaic_0001>
module attributes {stable_mosaic.version = 11 : i64} {
  func.func @condition_network_kernel(%arg0: memref<1x1xf32, #tpu.memory_space<smem>>, %arg1: memref<72x128xf32, #tpu.memory_space<vmem>>, %arg2: memref<1x128xf32, #tpu.memory_space<vmem>>) attributes {dimension_semantics = [], scalar_prefetch = 0 : i64, scratch_operands = 0 : i64, tpu.core_type = #tpu.core_type<tc>} {
    %c0 = arith.constant 0 : index
    %c0_0 = arith.constant 0 : index
    %0 = memref.load %arg0[%c0, %c0_0] : memref<1x1xf32, #tpu.memory_space<smem>>
    %c0_1 = arith.constant 0 : index
    %c0_2 = arith.constant 0 : index
    %1 = vector.load %arg1[%c0_1, %c0_2] : memref<72x128xf32, #tpu.memory_space<vmem>>, vector<1x32xf32>
    %c1 = arith.constant 1 : index
    %c0_3 = arith.constant 0 : index
    %2 = vector.load %arg1[%c1, %c0_3] : memref<72x128xf32, #tpu.memory_space<vmem>>, vector<1x32xf32>
    %c2 = arith.constant 2 : index
    %c0_4 = arith.constant 0 : index
    %3 = vector.load %arg1[%c2, %c0_4] : memref<72x128xf32, #tpu.memory_space<vmem>>, vector<1x32xf32>
    %c3 = arith.constant 3 : index
    %c0_5 = arith.constant 0 : index
    %4 = vector.load %arg1[%c3, %c0_5] : memref<72x128xf32, #tpu.memory_space<vmem>>, vector<1x128xf32>
    %c8 = arith.constant 8 : index
    %c0_6 = arith.constant 0 : index
    %5 = vector.load %arg1[%c8, %c0_6] : memref<72x128xf32, #tpu.memory_space<vmem>>, vector<32x32xf32>
    %c40 = arith.constant 40 : index
    %c0_7 = arith.constant 0 : index
    %6 = vector.load %arg1[%c40, %c0_7] : memref<72x128xf32, #tpu.memory_space<vmem>>, vector<32x128xf32>
    %7 = vector.broadcast %0 : f32 to vector<1x32xf32>
    %8 = arith.mulf %7, %1 : vector<1x32xf32>
    %9 = arith.addf %8, %2 : vector<1x32xf32>
    %cst = arith.constant 0.000000e+00 : f32
    %10 = vector.broadcast %cst : f32 to vector<1x32xf32>
    %11 = arith.maximumf %9, %10 : vector<1x32xf32>
    %cst_8 = arith.constant dense<0.000000e+00> : vector<1x32xf32>
    %12 = tpu.matmul %11, %5, %cst_8 {dimension_numbers = #tpu.dot_dimension_numbers<[1], [0], [0], [1], [0, 0, 1, 1], [], []>} : vector<1x32xf32>, vector<32x32xf32>, vector<1x32xf32> -> vector<1x32xf32>
    %13 = arith.addf %12, %3 : vector<1x32xf32>
    %cst_9 = arith.constant 0.000000e+00 : f32
    %14 = vector.broadcast %cst_9 : f32 to vector<1x32xf32>
    %15 = arith.maximumf %13, %14 : vector<1x32xf32>
    %cst_10 = arith.constant dense<0.000000e+00> : vector<1x128xf32>
    %16 = tpu.matmul %15, %6, %cst_10 {dimension_numbers = #tpu.dot_dimension_numbers<[1], [0], [0], [1], [0, 0, 1, 1], [], []>} : vector<1x32xf32>, vector<32x128xf32>, vector<1x128xf32> -> vector<1x128xf32>
    %17 = arith.addf %16, %4 : vector<1x128xf32>
    %cst_11 = arith.constant 0.000000e+00 : f32
    %18 = vector.broadcast %cst_11 : f32 to vector<1x128xf32>
    %19 = arith.maximumf %17, %18 : vector<1x128xf32>
    %20 = math.absf %17 : vector<1x128xf32>
    %cst_12 = arith.constant 0.000000e+00 : f32
    %21 = vector.broadcast %cst_12 : f32 to vector<1x128xf32>
    %22 = arith.subf %21, %20 : vector<1x128xf32>
    %23 = math.exp %22 : vector<1x128xf32>
    %24 = math.log1p %23 : vector<1x128xf32>
    %25 = arith.addf %19, %24 : vector<1x128xf32>
    %c0_13 = arith.constant 0 : index
    %c0_14 = arith.constant 0 : index
    %26 = vector.load %arg2[%c0_13, %c0_14] : memref<1x128xf32, #tpu.memory_space<vmem>>, vector<1x128xf32>
    tpu.vector_store %arg2[%c0_13, %c0_14], %25 {strides = array<i32>} : memref<1x128xf32, #tpu.memory_space<vmem>>, vector<1x128xf32>,
    return
  }
}

</mosaic_0001>

<llo_original>
// kernel: condition_network_forward.1
$region0: #{condition_network_forward.1}
  #allocation0 [shape = 'u32[]', space=smem, size = 0x4, offset = 0x4, fixed_abs, tag = 'smem constant byte address 0x4 - core index']
  #allocation1 [shape = 'u32[144,128]{1,0:T(1,128)}', space=vmem, size = 0x12000, scoped, tag = 'internal scratch']
  #allocation2 [shape = 'f32[1,1]{1,0:T(1,128)S(6)}', space=smem, size = 0x200, scoped, tag = 'scoped memory for condition_network_forward.1']
  %s0 = inlined_call_operand.<no memory space> [shape: f32[1,1], index: 0, kind: input, shape index: {}]
  %s1 = inlined_call_operand.hbm [shape: f32[72,128], index: 1, kind: input, shape index: {}]
  %s2 = inlined_call_operand.vmem [shape: f32[1,128], index: 2, kind: output, shape index: {}]
  %s3 = sld [smem:[#allocation0]]
  $region22: #{condition_network_forward.1} parent=0
    _
  %s5 = ssub.s32 1, %s3
  %s6 = scalar_select 0, %s5, %s3
  %7 = sst [smem:[#allocation2]] %s0
  $region1: #{condition_network_forward.1} parent=0
    #allocation3 [shape = 'u8[36864]{0}', space=vmem, size = 0x9000, scoped, tag = 'input window, operand 1, single buffered']
    #allocation4 [shape = 's32[1]{0}', space=sflag, size = 0x4, scoped, tag = 'scoped memory for condition_network_forward.1']
    %8 = vsyncpa [#allocation4], 0
    // Predicated region
    $region2: #{condition_network_forward.1} parent=1 // pred_check
      _
    $region3: #{condition_network_forward.1} parent=1 // pred_check_branch
      %10 = sbr.rel (0) target = $region5
    $region4: #{condition_network_forward.1} parent=1 // pred_region
      _
    $region5: #{condition_network_forward.1} parent=1 // pred_fallthru
      _
    // Predicated region
    $region6: #{condition_network_forward.1} parent=1 // pred_check
      _
    $region7: #{condition_network_forward.1} parent=1 // pred_check_branch
      %12 = sbr.rel (0) target = $region9
    $region8: #{condition_network_forward.1} parent=1 // pred_region
      %s14 = ssub.s32 1152, 1152
      %15 = vsyncadd [#allocation4], %s14
      %s16 = sshll.u32 [#allocation3], 4
      %s17 = int_to_ptr.vmem [resolvable:$true] %s16
      %22 = dma.hbm_to_vmem [thread:$0]  %s1, 1152, %s17, [#allocation4], 128, 128, 8
    $region9: #{condition_network_forward.1} parent=1 // pred_fallthru
      _
    // Predicated region
    $region10: #{condition_network_forward.1} parent=1 // pred_check
      _
    $region11: #{condition_network_forward.1} parent=1 // pred_check_branch
      %24 = sbr.rel (0) target = $region13
    $region12: #{condition_network_forward.1} parent=1 // pred_region
      %25 = dma.done [#allocation4], 1152
    $region13: #{condition_network_forward.1} parent=1 // pred_fallthru
      _
    %s26 = sld [smem:[#allocation2]]
    %v27 = vld [vmem:[#allocation3] sm:$0x1]
    %v28 = vld [vmem:[#allocation3 + $0x1] sm:$0x1]
    %v29 = vld [vmem:[#allocation3 + $0x2] sm:$0x1]
    %v30 = vld [vmem:[#allocation3 + $0x3] sm:$0x1]
    %v31 = vld [vmem:[#allocation3 + $0x8] sm:$0xff]
    %v32 = vld [vmem:[#allocation3 + $0x10] sm:$0xff]
    %v33 = vld [vmem:[#allocation3 + $0x18] sm:$0xff]
    %v34 = vld [vmem:[#allocation3 + $0x20] sm:$0xff]
    %v35 = vld [vmem:[#allocation3 + $0x28] sm:$0xff]
    %v36 = vld [vmem:[#allocation3 + $0x30] sm:$0xff]
    %v37 = vld [vmem:[#allocation3 + $0x38] sm:$0xff]
    %v38 = vld [vmem:[#allocation3 + $0x40] sm:$0xff]
    %v39 = vstv %s26
    %v40 = vmul.f32 %v39, %v27
    %v41 = vadd.f32 %v40, %v28
    %v42 = vmax.f32 %v41, 0.0
    %vm43 = vcmask 261120
    %v45 = vsel %vm43, %v42, 0
    %47 = vmatprep.subr.mxu0 0.0
    %48 = vmatpush1.msra.mxu0 0.0
    %49 = vmatprep.subr.mxu0 0.0
    %50 = vmatpush1.msra.mxu0 0.0
    %51 = vmatprep.subr.mxu0 0.0
    %52 = vmatpush1.msra.mxu0 0.0
    %53 = vmatprep.subr.mxu0 0.0
    %54 = vmatpush1.msra.mxu0 0.0
    %55 = vmatprep.subr.mxu0 0.0
    %56 = vmatpush1.msra.mxu0 0.0
    %57 = vmatprep.subr.mxu0 0.0
    %58 = vmatpush1.msra.mxu0 0.0
    %59 = vmatprep.subr.mxu0 0.0
    %60 = vmatpush1.msra.mxu0 0.0
    %61 = vmatprep.subr.mxu0 0.0
    %62 = vmatpush1.msra.mxu0 0.0
    %63 = vmatprep.subr.mxu0 0.0
    %64 = vmatpush1.msra.mxu0 0.0
    %65 = vmatprep.subr.mxu0 0.0
    %66 = vmatpush1.msra.mxu0 0.0
    %67 = vmatprep.subr.mxu0 0.0
    %68 = vmatpush1.msra.mxu0 0.0
    %69 = vmatprep.subr.mxu0 0.0
    %70 = vmatpush1.msra.mxu0 0.0
    %71 = vmatprep.subr.mxu0 0.0
    %72 = vmatpush1.msra.mxu0 %v34
    %73 = vmatprep.subr.mxu0 0.0
    %74 = vmatpush1.msra.mxu0 %v33
    %75 = vmatprep.subr.mxu0 0.0
    %76 = vmatpush1.msra.mxu0 %v32
    %77 = vmatprep.subr.mxu0 0.0
    %78 = vmatpush1.msra.mxu0 %v31
    %79 = vmatprep.subr.mxu0 0.0
    %80 = vmatpush2.msra.mxu0 0.0
    %81 = vmatprep.subr.mxu0 0.0
    %82 = vmatpush2.msra.mxu0 0.0
    %83 = vmatprep.subr.mxu0 0.0
    %84 = vmatpush2.msra.mxu0 0.0
    %85 = vmatprep.subr.mxu0 0.0
    %86 = vmatpush2.msra.mxu0 0.0
    %87 = vmatprep.subr.mxu0 0.0
    %88 = vmatpush2.msra.mxu0 0.0
    %89 = vmatprep.subr.mxu0 0.0
    %90 = vmatpush2.msra.mxu0 0.0
    %91 = vmatprep.subr.mxu0 0.0
    %92 = vmatpush2.msra.mxu0 0.0
    %93 = vmatprep.subr.mxu0 0.0
    %94 = vmatpush2.msra.mxu0 0.0
    %95 = vmatprep.subr.mxu0 0.0
    %96 = vmatpush2.msra.mxu0 0.0
    %97 = vmatprep.subr.mxu0 0.0
    %98 = vmatpush2.msra.mxu0 0.0
    %99 = vmatprep.subr.mxu0 0.0
    %100 = vmatpush2.msra.mxu0 0.0
    %101 = vmatprep.subr.mxu0 0.0
    %102 = vmatpush2.msra.mxu0 0.0
    %103 = vmatprep.subr.mxu0 0.0
    %104 = vmatpush2.msra.mxu0 0.0
    %105 = vmatprep.subr.mxu0 0.0
    %106 = vmatpush2.msra.mxu0 0.0
    %107 = vmatprep.subr.mxu0 0.0
    %108 = vmatpush2.msra.mxu0 0.0
    %109 = vmatprep.subr.mxu0 0.0
    %110 = vmatpush2.msra.mxu0 0.0
    %111 = vmatprep.mubr.f32.mxu0 0.0
    %112 = vmatmul.mubr.f32.gmra.mxu0 %v45
    %v113 = vpop.f32.mrf.mxu0
    %v114 = vadd.f32 %v29, %v113
    %v115 = vpop.f32.mrf.mxu0
    %116 = vdwg.mxu0
    %v117 = vmax.f32 %v114, 0.0
    %v119 = vsel %vm43, %v117, 0
    %121 = vmatprep.subr.mxu0 0.0
    %122 = vmatpush1.msra.mxu0 0.0
    %123 = vmatprep.subr.mxu0 0.0
    %124 = vmatpush1.msra.mxu0 0.0
    %125 = vmatprep.subr.mxu0 0.0
    %126 = vmatpush1.msra.mxu0 0.0
    %127 = vmatprep.subr.mxu0 0.0
    %128 = vmatpush1.msra.mxu0 0.0
    %129 = vmatprep.subr.mxu0 0.0
    %130 = vmatpush1.msra.mxu0 0.0
    %131 = vmatprep.subr.mxu0 0.0
    %132 = vmatpush1.msra.mxu0 0.0
    %133 = vmatprep.subr.mxu0 0.0
    %134 = vmatpush1.msra.mxu0 0.0
    %135 = vmatprep.subr.mxu0 0.0
    %136 = vmatpush1.msra.mxu0 0.0
    %137 = vmatprep.subr.mxu0 0.0
    %138 = vmatpush1.msra.mxu0 0.0
    %139 = vmatprep.subr.mxu0 0.0
    %140 = vmatpush1.msra.mxu0 0.0
    %141 = vmatprep.subr.mxu0 0.0
    %142 = vmatpush1.msra.mxu0 0.0
    %143 = vmatprep.subr.mxu0 0.0
    %144 = vmatpush1.msra.mxu0 0.0
    %145 = vmatprep.subr.mxu0 0.0
    %146 = vmatpush1.msra.mxu0 %v38
    %147 = vmatprep.subr.mxu0 0.0
    %148 = vmatpush1.msra.mxu0 %v37
    %149 = vmatprep.subr.mxu0 0.0
    %150 = vmatpush1.msra.mxu0 %v36
    %151 = vmatprep.subr.mxu0 0.0
    %152 = vmatpush1.msra.mxu0 %v35
    %153 = vmatprep.subr.mxu0 0.0
    %154 = vmatpush2.msra.mxu0 0.0
    %155 = vmatprep.subr.mxu0 0.0
    %156 = vmatpush2.msra.mxu0 0.0
    %157 = vmatprep.subr.mxu0 0.0
    %158 = vmatpush2.msra.mxu0 0.0
    %159 = vmatprep.subr.mxu0 0.0
    %160 = vmatpush2.msra.mxu0 0.0
    %161 = vmatprep.subr.mxu0 0.0
    %162 = vmatpush2.msra.mxu0 0.0
    %163 = vmatprep.subr.mxu0 0.0
    %164 = vmatpush2.msra.mxu0 0.0
    %165 = vmatprep.subr.mxu0 0.0
    %166 = vmatpush2.msra.mxu0 0.0
    %167 = vmatprep.subr.mxu0 0.0
    %168 = vmatpush2.msra.mxu0 0.0
    %169 = vmatprep.subr.mxu0 0.0
    %170 = vmatpush2.msra.mxu0 0.0
    %171 = vmatprep.subr.mxu0 0.0
    %172 = vmatpush2.msra.mxu0 0.0
    %173 = vmatprep.subr.mxu0 0.0
    %174 = vmatpush2.msra.mxu0 0.0
    %175 = vmatprep.subr.mxu0 0.0
    %176 = vmatpush2.msra.mxu0 0.0
    %177 = vmatprep.subr.mxu0 0.0
    %178 = vmatpush2.msra.mxu0 0.0
    %179 = vmatprep.subr.mxu0 0.0
    %180 = vmatpush2.msra.mxu0 0.0
    %181 = vmatprep.subr.mxu0 0.0
    %182 = vmatpush2.msra.mxu0 0.0
    %183 = vmatprep.subr.mxu0 0.0
    %184 = vmatpush2.msra.mxu0 0.0
    %185 = vmatprep.mubr.f32.mxu0 0.0
    %186 = vmatmul.mubr.f32.gmra.mxu0 %v119
    %v187 = vpop.f32.mrf.mxu0
    %v188 = vadd.f32 %v30, %v187
    %v189 = vpop.f32.mrf.mxu0
    %190 = vdwg.mxu0
    %v191 = vmax.f32 %v188, 0.0
    %v192 = vand.u32 2147483647, %v188
    %v193 = vsub.f32 0.0, %v192
    %v194 = vmul.f32 %v193, 1.442695
    %v195 = vpow.pop %v194
    %v196 = vadd.f32 %v195, 1.0
    %v197 = vlog2.pop %v196
    %v198 = vmul.f32 %v197, 0.6931472
    %v199 = vmul.f32 -0.5, %v195
    %v200 = vadd.f32 %v199, 1.0
    %v201 = vmul.f32 %v200, %v195
    %v202 = vand.u32 2147483647, %v195
    %vm203 = vcmp.lt.f32.partialorder %v202, 0.0004427343
    %v204 = vsel %vm203, %v201, %v198
    %v205 = vadd.f32 %v191, %v204
    %206 = vst [vmem:[%s2] sm:$0x1] %v205
    // Predicated region
    $region14: #{condition_network_forward.1} parent=1 // pred_check
      _
    $region15: #{condition_network_forward.1} parent=1 // pred_check_branch
      %208 = sbr.rel (0) target = $region17
    $region16: #{condition_network_forward.1} parent=1 // pred_region
      _
    $region17: #{condition_network_forward.1} parent=1 // pred_fallthru
      _
    // Predicated region
    $region18: #{condition_network_forward.1} parent=1 // pred_check
      _
    $region19: #{condition_network_forward.1} parent=1 // pred_check_branch
      %210 = sbr.rel (0) target = $region21
    $region20: #{condition_network_forward.1} parent=1 // pred_region
      _
    $region21: #{condition_network_forward.1} parent=1 // pred_fallthru
      _
    %211 = vsyncpa [#allocation4], 1

</llo_original>
